<compile_context>
chip_gen: v7x
topology: tpu7x:2x2x1
jax: 0.10.0
libtpu: 0.0.40
codegen_flags: <defaults>
</compile_context>

<pallas_src>
import functools

import jax
import jax.numpy as jnp
from jax import lax
from jax.experimental import pallas as pl
from jax.experimental.pallas import tpu as pltpu


def _round_up(x, m):
    return (x + m - 1) // m * m


def _choose_batch_tile(batch):
    """Batch tile: multiple of 8, <= 256, and keep >= 2 grid steps along the
    'parallel' batch axis when possible so v7x's two TensorCores both work."""
    b8 = _round_up(batch, 8)
    tb = min(256, b8)
    if b8 // tb < 2 and b8 >= 16:
        tb = max(8, (b8 // 2) // 8 * 8)
    return tb


def cbow_kernel(ids_ref, hi_ref, lo_ref, out_ref, acc_ref, *, inv_seq_len):
    # ids_ref: (TB, S)      int32 token ids for this batch tile
    # hi_ref : (TV, D_pad)  bf16 high part of the f32 table tile
    # lo_ref : (TV, D_pad)  bf16 low-order residual of the f32 table tile
    # out_ref: (TB, D_pad)  f32 mean-pooled sentence representations
    # acc_ref: (TB, D_pad)  f32 accumulator, resident across the vocab-tile axis
    k = pl.program_id(1)
    tb, seq = ids_ref.shape
    tv = hi_ref.shape[0]

    @pl.when(k == 0)
    def _():
        acc_ref[...] = jnp.zeros_like(acc_ref)

    # Shift token ids into this vocab tile's local range once (cheaper than
    # offsetting the (TB, TV) iota every step).
    ids = ids_ref[...] - k * tv
    iota = lax.broadcasted_iota(jnp.int32, (tb, tv), 1)

    # Bag-of-words counts for this vocab tile: integer compares/adds only inside
    # the unrolled S loop; single cast at the end (exact: counts <= S <= 256).
    counts = jnp.zeros((tb, tv), jnp.int32)
    for s in range(seq):  # small static trip count -> fully unrolled VPU adds
        counts = counts + (ids[:, s:s + 1] == iota).astype(jnp.int32)
    # int32 -> f32 -> bf16 (both casts exact for these magnitudes; via f32 to
    # stay on well-supported conversion paths).
    counts_bf16 = counts.astype(jnp.float32).astype(jnp.bfloat16)

    # Two native bf16 MXU passes reconstruct the f32 matmul (hi + lo == table to
    # ~2^-18 relative), replacing the ~6-pass f32 HIGHEST matmul.
    part = jnp.dot(counts_bf16, hi_ref[...], preferred_element_type=jnp.float32)
    part = part + jnp.dot(counts_bf16, lo_ref[...], preferred_element_type=jnp.float32)
    acc_ref[...] += part

    @pl.when(k == pl.num_programs(1) - 1)
    def _():
        out_ref[...] = (acc_ref[...] * inv_seq_len).astype(out_ref.dtype)


def prepare_embedding(table, *, vocab_tile=512):
    """One-time table prep (kept out of the per-call forward path): pad V and D
    to multiples of 128 / the vocab tile, then split the f32 table into two bf16
    parts so the kernel can run cheap, (near-)exact bf16 MXU passes."""
    V, D = table.shape
    D_pad = _round_up(D, 128)
    V_pad = _round_up(V, 128)
    tv = min(vocab_tile, V_pad)
    V_pad = _round_up(V_pad, tv)
    t = table.astype(jnp.float32)
    if (V_pad, D_pad) != (V, D):
        t = jnp.pad(t, ((0, V_pad - V), (0, D_pad - D)))
    hi = t.astype(jnp.bfloat16)
    lo = (t - hi.astype(jnp.float32)).astype(jnp.bfloat16)
    return hi, lo, tv, D


def cbow_forward(indices, table_hi, table_lo, vocab_tile, embed_dim):
    """indices: (B, S) int; prepared tables: (V_pad, D_pad) bf16 -> (B, embed_dim) f32."""
    B, S = indices.shape
    V_pad, D_pad = table_hi.shape
    TV = vocab_tile
    assert V_pad % TV == 0 and D_pad % 128 == 0

    TB = _choose_batch_tile(B)
    B_pad = _round_up(B, TB)

    ids = indices.astype(jnp.int32)
    if B_pad != B:
        # Padded rows use token 0 and are sliced off below.
        ids = jnp.pad(ids, ((0, B_pad - B), (0, 0)))

    n_b = B_pad // TB
    n_v = V_pad // TV

    # Explicit scoped-VMEM budget: double-buffered blocks + accumulator +
    # in-kernel counts intermediates, with headroom (v5e default scoped limit is
    # only ~16 MiB; v7x has 64 MiB/TC physical).
    block_bytes = (2 * TB * S * 4            # ids blocks (double-buffered)
                   + 2 * 2 * TV * D_pad * 2  # hi + lo bf16 table blocks
                   + 2 * TB * D_pad * 4      # output blocks
                   + TB * D_pad * 4          # f32 accumulator scratch
                   + TB * TV * 8)            # counts intermediates
    vmem_limit = int(min(100 * 2 ** 20, max(32 * 2 ** 20, 4 * block_bytes)))

    kernel = functools.partial(cbow_kernel, inv_seq_len=1.0 / S)

    out = pl.pallas_call(
        kernel,
        out_shape=jax.ShapeDtypeStruct((B_pad, D_pad), jnp.float32),
        grid_spec=pltpu.PrefetchScalarGridSpec(
            num_scalar_prefetch=0,
            grid=(n_b, n_v),  # vocab-tile reduction axis last (inner)
            in_specs=[
                # Token ids for the current batch tile (constant across k).
                pl.BlockSpec((TB, S), lambda i, k: (i, 0)),
                # Streamed table tiles (hi / lo bf16 parts).
                pl.BlockSpec((TV, D_pad), lambda i, k: (k, 0)),
                pl.BlockSpec((TV, D_pad), lambda i, k: (k, 0)),
            ],
            out_specs=pl.BlockSpec((TB, D_pad), lambda i, k: (i, 0)),
            scratch_shapes=[pltpu.VMEM((TB, D_pad), jnp.float32)],
        ),
        compiler_params=pltpu.CompilerParams(
            dimension_semantics=("parallel", "arbitrary"),
            vmem_limit_bytes=vmem_limit,
        ),
    )(ids, table_hi, table_lo)
    return out[:B, :embed_dim]


def make_embedding(vocab_size, embed_dim, key):
    # nn.Embedding default init ~ N(0, 1); padding_idx=0 row is zeroed.
    w = jax.random.normal(key, (vocab_size, embed_dim), dtype=jnp.float32)
    w = w.at[0].set(0.0)
    return w


if __name__ == "__main__":
    vocab_size = 64
    embed_dim = 128
    batch = 16
    seq = 8

    key = jax.random.PRNGKey(0)
    k_emb, k_idx = jax.random.split(key)

    emb_table = make_embedding(vocab_size, embed_dim, k_emb)
    x = jax.random.randint(k_idx, (batch, seq), 0, vocab_size, dtype=jnp.int32)

    # One-time prep (pad + hi/lo bf16 split), then the kernel forward.
    table_hi, table_lo, vocab_tile, d = prepare_embedding(emb_table)
    out = cbow_forward(x, table_hi, table_lo, vocab_tile, d)
    out = jax.block_until_ready(out)

    # Reference (plain JAX, f32): embedding lookup + mean over the seq dim.
    ref = jnp.mean(emb_table[x], axis=1)
    assert out.shape == (batch, embed_dim)
    # hi/lo bf16 split reconstructs the f32 table to ~2^-18 relative error.
    assert jnp.allclose(out, ref, atol=1e-4, rtol=1e-4)

    print("KERNEL_OK")
</pallas_src>

<mosaic_0001>
module attributes {stable_mosaic.version = 11 : i64} {
  func.func @cbow_kernel(%arg0: i32, %arg1: i32, %arg2: memref<8x8xi32, #tpu.memory_space<vmem>>, %arg3: memref<128x128xbf16, #tpu.memory_space<vmem>>, %arg4: memref<128x128xbf16, #tpu.memory_space<vmem>>, %arg5: memref<8x128xf32, #tpu.memory_space<vmem>>, %arg6: memref<8x128xf32, #tpu.memory_space<vmem>>) attributes {dimension_semantics = [#tpu.dimension_semantics<parallel>, #tpu.dimension_semantics<arbitrary>], iteration_bounds = array<i64: 2, 1>, scalar_prefetch = 0 : i64, scratch_operands = 1 : i64, tpu.core_type = #tpu.core_type<tc>, window_params = [{transform_indices = @transform_0, window_bounds = array<i64: 8, 8>}, {transform_indices = @transform_1, window_bounds = array<i64: 128, 128>}, {transform_indices = @transform_2, window_bounds = array<i64: 128, 128>}, {transform_indices = @transform_3, window_bounds = array<i64: 8, 128>}]} {
    %c0_i32 = arith.constant 0 : i32
    %0 = arith.cmpi eq, %arg1, %c0_i32 : i32
    %1 = arith.extui %0 : i1 to i32
    %c0_i32_0 = arith.constant 0 : i32
    %2 = arith.cmpi ne, %1, %c0_i32_0 : i32
    scf.if %2 {
      %cst_14 = arith.constant 0.000000e+00 : f32
      %62 = vector.broadcast %cst_14 : f32 to vector<8x128xf32>
      %c0_15 = arith.constant 0 : index
      %c0_16 = arith.constant 0 : index
      %63 = vector.load %arg6[%c0_15, %c0_16] : memref<8x128xf32, #tpu.memory_space<vmem>>, vector<8x128xf32>
      tpu.vector_store %arg6[%c0_15, %c0_16], %62 {strides = array<i32>} : memref<8x128xf32, #tpu.memory_space<vmem>>, vector<8x128xf32>,
    } else {
    }
    %c0 = arith.constant 0 : index
    %c0_1 = arith.constant 0 : index
    %3 = vector.load %arg2[%c0, %c0_1] : memref<8x8xi32, #tpu.memory_space<vmem>>, vector<8x8xi32>
    %c128_i32 = arith.constant 128 : i32
    %4 = arith.muli %arg1, %c128_i32 : i32
    %5 = vector.broadcast %4 : i32 to vector<8x8xi32>
    %6 = arith.subi %3, %5 : vector<8x8xi32>
    %7 = tpu.iota {dimensions = array<i32: 1>} : vector<8x128xi32>
    %c0_i32_2 = arith.constant 0 : i32
    %8 = vector.broadcast %c0_i32_2 : i32 to vector<8x128xi32>
    %9 = vector.extract_strided_slice %6 {offsets = [0, 0], sizes = [8, 1], strides = [1, 1]} : vector<8x8xi32> to vector<8x1xi32>
    %10 = vector.broadcast %9 : vector<8x1xi32> to vector<8x128xi32>
    %11 = arith.cmpi eq, %10, %7 : vector<8x128xi32>
    %12 = arith.extui %11 : vector<8x128xi1> to vector<8x128xi32>
    %13 = arith.addi %8, %12 : vector<8x128xi32>
    %14 = vector.extract_strided_slice %6 {offsets = [0, 1], sizes = [8, 1], strides = [1, 1]} : vector<8x8xi32> to vector<8x1xi32>
    %15 = vector.broadcast %14 : vector<8x1xi32> to vector<8x128xi32>
    %16 = arith.cmpi eq, %15, %7 : vector<8x128xi32>
    %17 = arith.extui %16 : vector<8x128xi1> to vector<8x128xi32>
    %18 = arith.addi %13, %17 : vector<8x128xi32>
    %19 = vector.extract_strided_slice %6 {offsets = [0, 2], sizes = [8, 1], strides = [1, 1]} : vector<8x8xi32> to vector<8x1xi32>
    %20 = vector.broadcast %19 : vector<8x1xi32> to vector<8x128xi32>
    %21 = arith.cmpi eq, %20, %7 : vector<8x128xi32>
    %22 = arith.extui %21 : vector<8x128xi1> to vector<8x128xi32>
    %23 = arith.addi %18, %22 : vector<8x128xi32>
    %24 = vector.extract_strided_slice %6 {offsets = [0, 3], sizes = [8, 1], strides = [1, 1]} : vector<8x8xi32> to vector<8x1xi32>
    %25 = vector.broadcast %24 : vector<8x1xi32> to vector<8x128xi32>
    %26 = arith.cmpi eq, %25, %7 : vector<8x128xi32>
    %27 = arith.extui %26 : vector<8x128xi1> to vector<8x128xi32>
    %28 = arith.addi %23, %27 : vector<8x128xi32>
    %29 = vector.extract_strided_slice %6 {offsets = [0, 4], sizes = [8, 1], strides = [1, 1]} : vector<8x8xi32> to vector<8x1xi32>
    %30 = vector.broadcast %29 : vector<8x1xi32> to vector<8x128xi32>
    %31 = arith.cmpi eq, %30, %7 : vector<8x128xi32>
    %32 = arith.extui %31 : vector<8x128xi1> to vector<8x128xi32>
    %33 = arith.addi %28, %32 : vector<8x128xi32>
    %34 = vector.extract_strided_slice %6 {offsets = [0, 5], sizes = [8, 1], strides = [1, 1]} : vector<8x8xi32> to vector<8x1xi32>
    %35 = vector.broadcast %34 : vector<8x1xi32> to vector<8x128xi32>
    %36 = arith.cmpi eq, %35, %7 : vector<8x128xi32>
    %37 = arith.extui %36 : vector<8x128xi1> to vector<8x128xi32>
    %38 = arith.addi %33, %37 : vector<8x128xi32>
    %39 = vector.extract_strided_slice %6 {offsets = [0, 6], sizes = [8, 1], strides = [1, 1]} : vector<8x8xi32> to vector<8x1xi32>
    %40 = vector.broadcast %39 : vector<8x1xi32> to vector<8x128xi32>
    %41 = arith.cmpi eq, %40, %7 : vector<8x128xi32>
    %42 = arith.extui %41 : vector<8x128xi1> to vector<8x128xi32>
    %43 = arith.addi %38, %42 : vector<8x128xi32>
    %44 = vector.extract_strided_slice %6 {offsets = [0, 7], sizes = [8, 1], strides = [1, 1]} : vector<8x8xi32> to vector<8x1xi32>
    %45 = vector.broadcast %44 : vector<8x1xi32> to vector<8x128xi32>
    %46 = arith.cmpi eq, %45, %7 : vector<8x128xi32>
    %47 = arith.extui %46 : vector<8x128xi1> to vector<8x128xi32>
    %48 = arith.addi %43, %47 : vector<8x128xi32>
    %49 = arith.sitofp %48 : vector<8x128xi32> to vector<8x128xf32>
    %50 = arith.truncf %49 : vector<8x128xf32> to vector<8x128xbf16>
    %c0_3 = arith.constant 0 : index
    %c0_4 = arith.constant 0 : index
    %51 = vector.load %arg3[%c0_3, %c0_4] : memref<128x128xbf16, #tpu.memory_space<vmem>>, vector<128x128xbf16>
    %cst = arith.constant dense<0.000000e+00> : vector<8x128xf32>
    %52 = tpu.matmul %50, %51, %cst {dimension_numbers = #tpu.dot_dimension_numbers<[1], [0], [0], [1], [0, 0, 1, 1], [], []>} : vector<8x128xbf16>, vector<128x128xbf16>, vector<8x128xf32> -> vector<8x128xf32>
    %c0_5 = arith.constant 0 : index
    %c0_6 = arith.constant 0 : index
    %53 = vector.load %arg4[%c0_5, %c0_6] : memref<128x128xbf16, #tpu.memory_space<vmem>>, vector<128x128xbf16>
    %cst_7 = arith.constant dense<0.000000e+00> : vector<8x128xf32>
    %54 = tpu.matmul %50, %53, %cst_7 {dimension_numbers = #tpu.dot_dimension_numbers<[1], [0], [0], [1], [0, 0, 1, 1], [], []>} : vector<8x128xbf16>, vector<128x128xbf16>, vector<8x128xf32> -> vector<8x128xf32>
    %55 = arith.addf %52, %54 : vector<8x128xf32>
    %c0_8 = arith.constant 0 : index
    %c0_9 = arith.constant 0 : index
    %56 = vector.load %arg6[%c0_8, %c0_9] : memref<8x128xf32, #tpu.memory_space<vmem>>, vector<8x128xf32>
    %57 = arith.addf %56, %55 : vector<8x128xf32>
    %c0_10 = arith.constant 0 : index
    %c0_11 = arith.constant 0 : index
    %58 = vector.load %arg6[%c0_10, %c0_11] : memref<8x128xf32, #tpu.memory_space<vmem>>, vector<8x128xf32>
    tpu.vector_store %arg6[%c0_10, %c0_11], %57 {strides = array<i32>} : memref<8x128xf32, #tpu.memory_space<vmem>>, vector<8x128xf32>,
    %c0_i32_12 = arith.constant 0 : i32
    %59 = arith.cmpi eq, %arg1, %c0_i32_12 : i32
    %60 = arith.extui %59 : i1 to i32
    %c0_i32_13 = arith.constant 0 : i32
    %61 = arith.cmpi ne, %60, %c0_i32_13 : i32
    scf.if %61 {
      %c0_14 = arith.constant 0 : index
      %c0_15 = arith.constant 0 : index
      %62 = vector.load %arg6[%c0_14, %c0_15] : memref<8x128xf32, #tpu.memory_space<vmem>>, vector<8x128xf32>
      %cst_16 = arith.constant 1.250000e-01 : f32
      %63 = vector.broadcast %cst_16 : f32 to vector<8x128xf32>
      %64 = arith.mulf %62, %63 : vector<8x128xf32>
      %c0_17 = arith.constant 0 : index
      %c0_18 = arith.constant 0 : index
      %65 = vector.load %arg5[%c0_17, %c0_18] : memref<8x128xf32, #tpu.memory_space<vmem>>, vector<8x128xf32>
      tpu.vector_store %arg5[%c0_17, %c0_18], %64 {strides = array<i32>} : memref<8x128xf32, #tpu.memory_space<vmem>>, vector<8x128xf32>,
    } else {
    }
    return
  }
  func.func @transform_0(%arg0: i32, %arg1: i32) -> (i32, i32) {
    %c0_i32 = arith.constant 0 : i32
    %c0_i32_0 = arith.constant 0 : i32
    return %arg0, %c0_i32 : i32, i32
  }
  func.func @transform_1(%arg0: i32, %arg1: i32) -> (i32, i32) {
    %c0_i32 = arith.constant 0 : i32
    %c0_i32_0 = arith.constant 0 : i32
    return %arg1, %c0_i32 : i32, i32
  }
  func.func @transform_2(%arg0: i32, %arg1: i32) -> (i32, i32) {
    %c0_i32 = arith.constant 0 : i32
    %c0_i32_0 = arith.constant 0 : i32
    return %arg1, %c0_i32 : i32, i32
  }
  func.func @transform_3(%arg0: i32, %arg1: i32) -> (i32, i32) {
    %c0_i32 = arith.constant 0 : i32
    %c0_i32_0 = arith.constant 0 : i32
    return %arg0, %c0_i32 : i32, i32
  }
}

</mosaic_0001>

<llo_original>
// kernel: tpu_custom_call.1
$region0: #{tpu_custom_call.1}
  #allocation0 [shape = 'u32[]', space=smem, size = 0x4, offset = 0x4, fixed_abs, tag = 'smem constant byte address 0x4 - core index']
  #allocation1 [shape = 'u32[144,128]{1,0:T(1,128)}', space=vmem, size = 0x12000, scoped, tag = 'internal scratch']
  #allocation2 [shape = 'f32[8,128]{1,0:T(8,128)}', space=vmem, size = 0x1000, scoped, tag = 'scratch operand']
  %s0 = inlined_call_operand.vmem [shape: s32[16,8], index: 0, kind: input, shape index: {}]
  %s1 = inlined_call_operand.hbm [shape: bf16[128,128], index: 1, kind: input, shape index: {}]
  %s2 = inlined_call_operand.hbm [shape: bf16[128,128], index: 2, kind: input, shape index: {}]
  %s3 = inlined_call_operand.hbm [shape: f32[16,128], index: 3, kind: output, shape index: {}]
  %s4 = sld [smem:[#allocation0]]
  $region61: #{tpu_custom_call.1} parent=0
    _
  %s6 = ssub.s32 1, %s4
  %s7 = scalar_select 0, %s6, %s4
  $region1: #{tpu_custom_call.1} parent=0
    #allocation3 [shape = 'u8[32768]{0}', space=vmem, size = 0x8000, scoped, tag = 'input window, operand 1, single buffered']
    #allocation4 [shape = 's32[2]{0}', space=sflag, size = 0x8, scoped, tag = 'scoped memory for tpu_custom_call.1']
    #allocation5 [shape = 's32[2]{0}', space=sflag, size = 0x8, scoped, tag = 'scoped memory for tpu_custom_call.1']
    #allocation6 [shape = 'u8[32768]{0}', space=vmem, size = 0x8000, scoped, tag = 'input window, operand 2, single buffered']
    #allocation7 [shape = 's32[1]{0}', space=sflag, size = 0x4, scoped, tag = 'scoped memory for tpu_custom_call.1']
    #allocation8 [shape = 'u8[8192]{0}', space=vmem, size = 0x2000, scoped, tag = 'output window, operand 0']
    %8 = vsyncpa [#allocation4], 0
    %9 = vsyncpa [#allocation7], 0
    %10 = vsyncpa [#allocation5], 0
    %s11 = scalar_lea.sflag [#allocation5], 1
    %12 = vsyncpa %s11, 0
    loop: start=0, step=1, limit=4
    $region2: #{tpu_custom_call.1} parent=1 // loop_pre_header
      _
    $region3: #{tpu_custom_call.1} parent=1 // loop_header
      %s14 = sphi 0, %s18
      %p15 = scmp.ge.s32.totalorder %s14, 4
      %s21 = sphi 0, %s33
      %s22 = sphi 0, %s29
      %s23 = sphi 0, %s21
      %s24 = sphi 0, %s22
      %s25 = sphi 0, %s23
      %s26 = sphi 0, %s24
      %s36 = sphi 0, %s38
      %s39 = sphi 0, %s36
      %s40 = sphi 0, %s39
      %s56 = sphi 0, %s40
      %s62 = sphi 0, %s64
      %s65 = sphi 0, %s62
      %s66 = sphi 0, %s65
      %s82 = sphi 0, %s66
      %s88 = sphi 0, %s90
      %s91 = sphi 0, %s88
      %s92 = sphi 0, %s91
      %s108 = sphi 0, %s92
      %s114 = sphi 0, %s116
      %s117 = sphi 0, %s114
      %s118 = sphi 0, %s117
      %s134 = sphi 0, %s118
    $region4: #{tpu_custom_call.1} parent=1 // loop_header_branch
      %17 = sbr.rel (%p15) target = $region8
    $region5: #{tpu_custom_call.1} parent=1 // loop_body
      %s19 = ssub.s32 %s14, 1
      %s20 = ssub.s32 %s14, 2
      %s27 = sadd.s32 1, %s22
      %p28 = scmp.ge.s32.totalorder %s27, 1
      %s29 = scalar_select %p28, 0, %s27
      %s30 = sadd.s32 1, %s21
      %s31 = scalar_select %p28, %s30, %s21
      %p32 = scmp.ge.s32.totalorder %s31, 2
      %s33 = scalar_select %p32, 0, %s31
      %s34 = ssub.s32 %s21, %s33
      %p35 = scmp.eq.s32.totalorder %s34, 0
      %s37 = sadd.s32 %s36, 1
      %s38 = scalar_select %p35, %s36, %s37
      %p41 = pneg %p35
      %p42 = scmp.eq.s32.totalorder %s14, 1
      %p43 = por %p41, %p42
      %p44 = scmp.ne.s32.totalorder %s36, %s39
      %p45 = scmp.eq.s32.totalorder %s14, 0
      %p46 = por %p44, %p45
      %p47 = scmp.ne.s32.totalorder %s36, %s39
      %p48 = scmp.eq.s32.totalorder %s19, 1
      %p49 = por %p47, %p48
      %p50 = scmp.ne.s32.totalorder %s39, %s40
      %p51 = scmp.eq.s32.totalorder %s19, 0
      %p52 = por %p50, %p51
      %p53 = scmp.ne.s32.totalorder %s39, %s40
      %p54 = scmp.eq.s32.totalorder %s20, 1
      %p55 = por %p53, %p54
      %p57 = scmp.ne.s32.totalorder %s40, %s56
      %p58 = scmp.eq.s32.totalorder %s20, 0
      %p59 = por %p57, %p58
      %s60 = ssub.s32 %s22, %s29
      %p61 = scmp.eq.s32.totalorder %s60, 0
      %s63 = sadd.s32 %s62, 1
      %s64 = scalar_select %p61, %s62, %s63
      %p67 = pneg %p61
      %p68 = scmp.eq.s32.totalorder %s14, 1
      %p69 = por %p67, %p68
      %p70 = scmp.ne.s32.totalorder %s62, %s65
      %p71 = scmp.eq.s32.totalorder %s14, 0
      %p72 = por %p70, %p71
      %p73 = scmp.ne.s32.totalorder %s62, %s65
      %p74 = scmp.eq.s32.totalorder %s19, 1
      %p75 = por %p73, %p74
      %p76 = scmp.ne.s32.totalorder %s65, %s66
      %p77 = scmp.eq.s32.totalorder %s19, 0
      %p78 = por %p76, %p77
      %p79 = scmp.ne.s32.totalorder %s65, %s66
      %p80 = scmp.eq.s32.totalorder %s20, 1
      %p81 = por %p79, %p80
      %p83 = scmp.ne.s32.totalorder %s66, %s82
      %p84 = scmp.eq.s32.totalorder %s20, 0
      %p85 = por %p83, %p84
      %s86 = ssub.s32 %s22, %s29
      %p87 = scmp.eq.s32.totalorder %s86, 0
      %s89 = sadd.s32 %s88, 1
      %s90 = scalar_select %p87, %s88, %s89
      %p93 = pneg %p87
      %p94 = scmp.eq.s32.totalorder %s14, 1
      %p95 = por %p93, %p94
      %p96 = scmp.ne.s32.totalorder %s88, %s91
      %p97 = scmp.eq.s32.totalorder %s14, 0
      %p98 = por %p96, %p97
      %p99 = scmp.ne.s32.totalorder %s88, %s91
      %p100 = scmp.eq.s32.totalorder %s19, 1
      %p101 = por %p99, %p100
      %p102 = scmp.ne.s32.totalorder %s91, %s92
      %p103 = scmp.eq.s32.totalorder %s19, 0
      %p104 = por %p102, %p103
      %p105 = scmp.ne.s32.totalorder %s91, %s92
      %p106 = scmp.eq.s32.totalorder %s20, 1
      %p107 = por %p105, %p106
      %p109 = scmp.ne.s32.totalorder %s92, %s108
      %p110 = scmp.eq.s32.totalorder %s20, 0
      %p111 = por %p109, %p110
      %s112 = ssub.s32 %s21, %s33
      %p113 = scmp.eq.s32.totalorder %s112, 0
      %s115 = sadd.s32 %s114, 1
      %s116 = scalar_select %p113, %s114, %s115
      %p119 = pneg %p113
      %p120 = scmp.eq.s32.totalorder %s14, 1
      %p121 = por %p119, %p120
      %p122 = scmp.ne.s32.totalorder %s114, %s117
      %p123 = scmp.eq.s32.totalorder %s14, 0
      %p124 = por %p122, %p123
      %p125 = scmp.ne.s32.totalorder %s114, %s117
      %p126 = scmp.eq.s32.totalorder %s19, 1
      %p127 = por %p125, %p126
      %p128 = scmp.ne.s32.totalorder %s117, %s118
      %p129 = scmp.eq.s32.totalorder %s19, 0
      %p130 = por %p128, %p129
      %p131 = scmp.ne.s32.totalorder %s117, %s118
      %p132 = scmp.eq.s32.totalorder %s20, 1
      %p133 = por %p131, %p132
      %p135 = scmp.ne.s32.totalorder %s118, %s134
      %p136 = scmp.eq.s32.totalorder %s20, 0
      %p137 = por %p135, %p136
      %p138 = scmp.le.s32.totalorder 1, %s14
      %p139 = scmp.lt.s32.totalorder %s14, 3
      %p140 = pnand %p138, %p139
      %p141 = pneg %p140
      // Predicated region
      $region9: #{tpu_custom_call.1} parent=5 // pred_check
        _
      $region10: #{tpu_custom_call.1} parent=5 // pred_check_branch
        %143 = sbr.rel (%p140) target = $region12
      $region11: #{tpu_custom_call.1} parent=5 // pred_region
        %s144 = ssub.s32 %s14, 1
        // Predicated region
        $region13: #{tpu_custom_call.1} parent=11 // pred_check
          %p145 = pneg %p78
        $region14: #{tpu_custom_call.1} parent=11 // pred_check_branch
          %147 = sbr.rel (%p145) target = $region16
        $region15: #{tpu_custom_call.1} parent=11 // pred_region
          %s148 = smul.u32 16, %s24
          %s150 = ssub.s32 1024, 1024
          %151 = vsyncadd [#allocation4], %s150
          %s152 = smul.addr %s148, 64
          %s153 = scalar_lea.hbm %s1, %s152
          %s154 = sshll.u32 [#allocation3], 4
          %s155 = int_to_ptr.vmem [resolvable:$true] %s154
          %160 = dma.hbm_to_vmem [thread:$0]  %s153, 1024, %s155, [#allocation4], 64, 64, 4
        $region16: #{tpu_custom_call.1} parent=11 // pred_fallthru
          _
        // Predicated region
        $region17: #{tpu_custom_call.1} parent=11 // pred_check
          %p161 = pneg %p104
        $region18: #{tpu_custom_call.1} parent=11 // pred_check_branch
          %163 = sbr.rel (%p161) target = $region20
        $region19: #{tpu_custom_call.1} parent=11 // pred_region
          %s164 = smul.u32 16, %s24
          %s166 = ssub.s32 1024, 1024
          %167 = vsyncadd [#allocation7], %s166
          %s168 = smul.addr %s164, 64
          %s169 = scalar_lea.hbm %s2, %s168
          %s170 = sshll.u32 [#allocation6], 4
          %s171 = int_to_ptr.vmem [resolvable:$true] %s170
          %176 = dma.hbm_to_vmem [thread:$0]  %s169, 1024, %s171, [#allocation7], 64, 64, 4
        $region20: #{tpu_custom_call.1} parent=11 // pred_fallthru
          _
      $region12: #{tpu_custom_call.1} parent=5 // pred_fallthru
        _
      %p177 = scmp.lt.s32.totalorder %s14, 2
      // Predicated region
      $region21: #{tpu_custom_call.1} parent=5 // pred_check
        %p178 = pneg %p177
      $region22: #{tpu_custom_call.1} parent=5 // pred_check_branch
        %180 = sbr.rel (%p178) target = $region24
      $region23: #{tpu_custom_call.1} parent=5 // pred_region
        // Predicated region
        $region25: #{tpu_custom_call.1} parent=23 // pred_check
          %p181 = pneg %p46
        $region26: #{tpu_custom_call.1} parent=23 // pred_check_branch
          %183 = sbr.rel (%p181) target = $region28
        $region27: #{tpu_custom_call.1} parent=23 // pred_region
          %p184 = scmp.lt.s32.totalorder %s21, 1
          %s185 = scalar_select %p184, %s21, 1
          %s186 = smul.addr %s185, 8
          %s187 = scalar_lea.vmem %s0, %s186
        $region28: #{tpu_custom_call.1} parent=23 // pred_fallthru
          _
      $region24: #{tpu_custom_call.1} parent=5 // pred_fallthru
        _
      %p188 = scmp.le.s32.totalorder 1, %s14
      %p189 = scmp.lt.s32.totalorder %s14, 3
      %p190 = pnand %p188, %p189
      %p191 = pneg %p190
      // Predicated region
      $region29: #{tpu_custom_call.1} parent=5 // pred_check
        _
      $region30: #{tpu_custom_call.1} parent=5 // pred_check_branch
        %193 = sbr.rel (%p190) target = $region32
      $region31: #{tpu_custom_call.1} parent=5 // pred_region
        %s194 = ssub.s32 %s14, 1
        // Predicated region
        $region33: #{tpu_custom_call.1} parent=31 // pred_check
          %p195 = pneg %p78
        $region34: #{tpu_custom_call.1} parent=31 // pred_check_branch
          %197 = sbr.rel (%p195) target = $region36
        $region35: #{tpu_custom_call.1} parent=31 // pred_region
          %198 = dma.done [#allocation4], 1024
        $region36: #{tpu_custom_call.1} parent=31 // pred_fallthru
          _
        // Predicated region
        $region37: #{tpu_custom_call.1} parent=31 // pred_check
          %p199 = pneg %p104
        $region38: #{tpu_custom_call.1} parent=31 // pred_check_branch
          %201 = sbr.rel (%p199) target = $region40
        $region39: #{tpu_custom_call.1} parent=31 // pred_region
          %202 = dma.done [#allocation7], 1024
        $region40: #{tpu_custom_call.1} parent=31 // pred_fallthru
          _
        %p203 = scmp.lt.s32.totalorder %s23, 1
        %s204 = scalar_select %p203, %s23, 1
        %s205 = smul.addr %s204, 8
        %s206 = scalar_lea.vmem %s0, %s205
        %p207 = pneg %p52
        %p208 = pneg %p49
        %p209 = pneg %p78
        %p210 = pneg %p75
        %p211 = pneg %p104
        %p212 = pneg %p101
        %p213 = pneg %p130
        %p214 = pneg %p127
        %s215 = sand.u32 %s117, 1
        %s216 = scalar_lea.sflag [#allocation5], %s215
        %s217 = sand.u32 %s117, 1
        %s218 = smul.addr %s217, 8
        %s219 = scalar_lea.vmem [#allocation8], %s218
        %p220 = scmp.lt.s32.totalorder %s23, 1
        %s221 = scalar_select %p220, %s23, 1
        %s222 = smul.addr %s221, 8
        %s223 = scalar_lea.vmem %s0, %s222
        %s224 = smul.u32 16, %s24
        %s225 = smul.u32 16, %s24
        %p227 = scmp.eq.s32.totalorder %s24, 0
        // Predicated region
        $region41: #{tpu_custom_call.1} parent=31 // pred_check
          %p228 = pneg %p227
        $region42: #{tpu_custom_call.1} parent=31 // pred_check_branch
          %230 = sbr.rel (%p228) target = $region44
        $region43: #{tpu_custom_call.1} parent=31 // pred_region
          %231 = vst [vmem:[#allocation2] sm:$0xff] 0.0
        $region44: #{tpu_custom_call.1} parent=31 // pred_fallthru
          _
        %v232 = vld [vmem:[%s223] sm:$0xff]
        %s233 = smul.u32 %s24, 128
        %v234 = vstv %s233
        %v235 = vsub.s32 %v232, %v234
        %v236 = vlaneseq
        %v237 = vand.u32 %v236, 127
        %238 = vset.pattern.permute.xlu0 0
        %239 = vperm.xlu0 %238, %v235
        %v240 = vpop.permute.xlu0 %239
        %vm241 = vcmp.eq.s32.totalorder %v240, %v237
        %v242 = vsel %vm241, 1, 0
        %243 = vset.pattern.permute.xlu0 1
        %244 = vperm.xlu0 %243, %v235
        %v245 = vpop.permute.xlu0 %244
        %vm246 = vcmp.eq.s32.totalorder %v245, %v237
        %v247 = vsel %vm246, 1, 0
        %v248 = vadd.s32 %v242, %v247
        %249 = vset.pattern.permute.xlu0 2
        %250 = vperm.xlu0 %249, %v235
        %v251 = vpop.permute.xlu0 %250
        %vm252 = vcmp.eq.s32.totalorder %v251, %v237
        %v253 = vsel %vm252, 1, 0
        %v254 = vadd.s32 %v248, %v253
        %255 = vset.pattern.permute.xlu0 3
        %256 = vperm.xlu0 %255, %v235
        %v257 = vpop.permute.xlu0 %256
        %vm258 = vcmp.eq.s32.totalorder %v257, %v237
        %v259 = vsel %vm258, 1, 0
        %v260 = vadd.s32 %v254, %v259
        %261 = vset.pattern.permute.xlu0 4
        %262 = vperm.xlu0 %261, %v235
        %v263 = vpop.permute.xlu0 %262
        %vm264 = vcmp.eq.s32.totalorder %v263, %v237
        %v265 = vsel %vm264, 1, 0
        %v266 = vadd.s32 %v260, %v265
        %267 = vset.pattern.permute.xlu0 5
        %268 = vperm.xlu0 %267, %v235
        %v269 = vpop.permute.xlu0 %268
        %vm270 = vcmp.eq.s32.totalorder %v269, %v237
        %v271 = vsel %vm270, 1, 0
        %v272 = vadd.s32 %v266, %v271
        %273 = vset.pattern.permute.xlu0 6
        %274 = vperm.xlu0 %273, %v235
        %v275 = vpop.permute.xlu0 %274
        %vm276 = vcmp.eq.s32.totalorder %v275, %v237
        %v277 = vsel %vm276, 1, 0
        %v278 = vadd.s32 %v272, %v277
        %279 = vset.pattern.permute.xlu0 7
        %280 = vperm.xlu0 %279, %v235
        %v281 = vpop.permute.xlu0 %280
        %vm282 = vcmp.eq.s32.totalorder %v281, %v237
        %v283 = vsel %vm282, 1, 0
        %v284 = vadd.s32 %v278, %v283
        %v285 = vcvt.s32.f32 %v284
        %v286 = vpack.c.bf16 %v285, %v285
        %v287 = vld [vmem:[#allocation3] sm:$0xf]
        %v288 = vld [vmem:[#allocation3 + $0x4] sm:$0xf]
        %v289 = vld [vmem:[#allocation3 + $0x8] sm:$0xf]
        %v290 = vld [vmem:[#allocation3 + $0xc] sm:$0xf]
        %v291 = vld [vmem:[#allocation3 + $0x10] sm:$0xf]
        %v292 = vld [vmem:[#allocation3 + $0x14] sm:$0xf]
        %v293 = vld [vmem:[#allocation3 + $0x18] sm:$0xf]
        %v294 = vld [vmem:[#allocation3 + $0x1c] sm:$0xf]
        %v295 = vld [vmem:[#allocation3 + $0x20] sm:$0xf]
        %v296 = vld [vmem:[#allocation3 + $0x24] sm:$0xf]
        %v297 = vld [vmem:[#allocation3 + $0x28] sm:$0xf]
        %v298 = vld [vmem:[#allocation3 + $0x2c] sm:$0xf]
        %v299 = vld [vmem:[#allocation3 + $0x30] sm:$0xf]
        %v300 = vld [vmem:[#allocation3 + $0x34] sm:$0xf]
        %v301 = vld [vmem:[#allocation3 + $0x38] sm:$0xf]
        %v302 = vld [vmem:[#allocation3 + $0x3c] sm:$0xf]
        %v303 = vld [vmem:[#allocation6] sm:$0xf]
        %v304 = vld [vmem:[#allocation6 + $0x4] sm:$0xf]
        %v305 = vld [vmem:[#allocation6 + $0x8] sm:$0xf]
        %v306 = vld [vmem:[#allocation6 + $0xc] sm:$0xf]
        %v307 = vld [vmem:[#allocation6 + $0x10] sm:$0xf]
        %v308 = vld [vmem:[#allocation6 + $0x14] sm:$0xf]
        %v309 = vld [vmem:[#allocation6 + $0x18] sm:$0xf]
        %v310 = vld [vmem:[#allocation6 + $0x1c] sm:$0xf]
        %v311 = vld [vmem:[#allocation6 + $0x20] sm:$0xf]
        %v312 = vld [vmem:[#allocation6 + $0x24] sm:$0xf]
        %v313 = vld [vmem:[#allocation6 + $0x28] sm:$0xf]
        %v314 = vld [vmem:[#allocation6 + $0x2c] sm:$0xf]
        %v315 = vld [vmem:[#allocation6 + $0x30] sm:$0xf]
        %v316 = vld [vmem:[#allocation6 + $0x34] sm:$0xf]
        %v317 = vld [vmem:[#allocation6 + $0x38] sm:$0xf]
        %v318 = vld [vmem:[#allocation6 + $0x3c] sm:$0xf]
        %v335 = vunpack.c.l.b16 %v303
        %v336 = vunpack.c.l.b16 %v304
        %v337 = vunpack.c.l.b16 %v305
        %v338 = vunpack.c.l.b16 %v306
        %v339 = vunpack.c.l.b16 %v307
        %v340 = vunpack.c.l.b16 %v308
        %v341 = vunpack.c.l.b16 %v309
        %v342 = vunpack.c.l.b16 %v310
        %v343 = vunpack.c.l.b16 %v311
        %v344 = vunpack.c.l.b16 %v312
        %v345 = vunpack.c.l.b16 %v313
        %v346 = vunpack.c.l.b16 %v314
        %v347 = vunpack.c.l.b16 %v315
        %v348 = vunpack.c.l.b16 %v316
        %v349 = vunpack.c.l.b16 %v317
        %v350 = vunpack.c.l.b16 %v318
        %v351 = vpack.c.b16 %v336, %v335
        %v352 = vpack.c.b16 %v338, %v337
        %v353 = vpack.c.b16 %v340, %v339
        %v354 = vpack.c.b16 %v342, %v341
        %v355 = vpack.c.b16 %v344, %v343
        %v356 = vpack.c.b16 %v346, %v345
        %v357 = vpack.c.b16 %v348, %v347
        %v358 = vpack.c.b16 %v350, %v349
        %367 = vmatprep.subr.bf16.mxu0 0
        %368 = vmatpush1.bf16.msra.mxu0 %v351
        %369 = vmatprep.subr.bf16.mxu0 0
        %370 = vmatpush1.bf16.msra.mxu0 %v352
        %371 = vmatprep.subr.bf16.mxu0 0
        %372 = vmatpush1.bf16.msra.mxu0 %v353
        %373 = vmatprep.subr.bf16.mxu0 0
        %374 = vmatpush1.bf16.msra.mxu0 %v354
        %375 = vmatprep.subr.bf16.mxu0 0
        %376 = vmatpush1.bf16.msra.mxu0 %v355
        %377 = vmatprep.subr.bf16.mxu0 0
        %378 = vmatpush1.bf16.msra.mxu0 %v356
        %379 = vmatprep.subr.bf16.mxu0 0
        %380 = vmatpush1.bf16.msra.mxu0 %v357
        %381 = vmatprep.subr.bf16.mxu0 0
        %382 = vmatpush1.bf16.msra.mxu0 %v358
        %383 = vmatprep.subr.bf16.mxu0 0
        %384 = vmatpush1.bf16.msra.mxu0 0
        %385 = vmatprep.subr.bf16.mxu0 0
        %386 = vmatpush1.bf16.msra.mxu0 0
        %387 = vmatprep.subr.bf16.mxu0 0
        %388 = vmatpush1.bf16.msra.mxu0 0
        %389 = vmatprep.subr.bf16.mxu0 0
        %390 = vmatpush1.bf16.msra.mxu0 0
        %391 = vmatprep.subr.bf16.mxu0 0
        %392 = vmatpush1.bf16.msra.mxu0 0
        %393 = vmatprep.subr.bf16.mxu0 0
        %394 = vmatpush1.bf16.msra.mxu0 0
        %395 = vmatprep.subr.bf16.mxu0 0
        %396 = vmatpush1.bf16.msra.mxu0 0
        %397 = vmatprep.subr.bf16.mxu0 0
        %398 = vmatpush1.bf16.msra.mxu0 0
        %399 = vmatprep.mubr.bf16.mxu0 0
        %400 = vmatmul.mubr.bf16.gmra.mrb[0].mxu0 %v286
        %v401 = vpop.f32.mrb[0].mxu0
        %v402 = vadd.f32 0.0, %v401
        %v403 = vpop.f32.mrb[0].mxu0
        %v404 = vpop.f32.mrb[0].mxu0
        %v405 = vpop.f32.mrb[0].mxu0
        %406 = vdwg.mxu0
        %v423 = vunpack.c.l.b16 %v287
        %v424 = vunpack.c.l.b16 %v288
        %v425 = vunpack.c.l.b16 %v289
        %v426 = vunpack.c.l.b16 %v290
        %v427 = vunpack.c.l.b16 %v291
        %v428 = vunpack.c.l.b16 %v292
        %v429 = vunpack.c.l.b16 %v293
        %v430 = vunpack.c.l.b16 %v294
        %v431 = vunpack.c.l.b16 %v295
        %v432 = vunpack.c.l.b16 %v296
        %v433 = vunpack.c.l.b16 %v297
        %v434 = vunpack.c.l.b16 %v298
        %v435 = vunpack.c.l.b16 %v299
        %v436 = vunpack.c.l.b16 %v300
        %v437 = vunpack.c.l.b16 %v301
        %v438 = vunpack.c.l.b16 %v302
        %v439 = vpack.c.b16 %v424, %v423
        %v440 = vpack.c.b16 %v426, %v425
        %v441 = vpack.c.b16 %v428, %v427
        %v442 = vpack.c.b16 %v430, %v429
        %v443 = vpack.c.b16 %v432, %v431
        %v444 = vpack.c.b16 %v434, %v433
        %v445 = vpack.c.b16 %v436, %v435
        %v446 = vpack.c.b16 %v438, %v437
        %455 = vmatprep.subr.bf16.mxu0 0
        %456 = vmatpush1.bf16.msra.mxu0 %v439
        %457 = vmatprep.subr.bf16.mxu0 0
        %458 = vmatpush1.bf16.msra.mxu0 %v440
        %459 = vmatprep.subr.bf16.mxu0 0
        %460 = vmatpush1.bf16.msra.mxu0 %v441
        %461 = vmatprep.subr.bf16.mxu0 0
        %462 = vmatpush1.bf16.msra.mxu0 %v442
        %463 = vmatprep.subr.bf16.mxu0 0
        %464 = vmatpush1.bf16.msra.mxu0 %v443
        %465 = vmatprep.subr.bf16.mxu0 0
        %466 = vmatpush1.bf16.msra.mxu0 %v444
        %467 = vmatprep.subr.bf16.mxu0 0
        %468 = vmatpush1.bf16.msra.mxu0 %v445
        %469 = vmatprep.subr.bf16.mxu0 0
        %470 = vmatpush1.bf16.msra.mxu0 %v446
        %471 = vmatprep.subr.bf16.mxu0 0
        %472 = vmatpush1.bf16.msra.mxu0 0
        %473 = vmatprep.subr.bf16.mxu0 0
        %474 = vmatpush1.bf16.msra.mxu0 0
        %475 = vmatprep.subr.bf16.mxu0 0
        %476 = vmatpush1.bf16.msra.mxu0 0
        %477 = vmatprep.subr.bf16.mxu0 0
        %478 = vmatpush1.bf16.msra.mxu0 0
        %479 = vmatprep.subr.bf16.mxu0 0
        %480 = vmatpush1.bf16.msra.mxu0 0
        %481 = vmatprep.subr.bf16.mxu0 0
        %482 = vmatpush1.bf16.msra.mxu0 0
        %483 = vmatprep.subr.bf16.mxu0 0
        %484 = vmatpush1.bf16.msra.mxu0 0
        %485 = vmatprep.subr.bf16.mxu0 0
        %486 = vmatpush1.bf16.msra.mxu0 0
        %487 = vmatprep.mubr.bf16.mxu0 0
        %488 = vmatmul.mubr.bf16.gmra.mrb[0].mxu0 %v286
        %v489 = vpop.f32.mrb[0].mxu0
        %v490 = vadd.f32 %v402, %v489
        %v491 = vpop.f32.mrb[0].mxu0
        %v492 = vpop.f32.mrb[0].mxu0
        %v493 = vpop.f32.mrb[0].mxu0
        %494 = vdwg.mxu0
        %v495 = vld [vmem:[#allocation2] sm:$0xff]
        %v496 = vadd.f32 %v495, %v490
        %497 = vst [vmem:[#allocation2] sm:$0xff] %v496
        // Predicated region
        $region45: #{tpu_custom_call.1} parent=31 // pred_check
          %p498 = pneg %p227
        $region46: #{tpu_custom_call.1} parent=31 // pred_check_branch
          %500 = sbr.rel (%p498) target = $region48
        $region47: #{tpu_custom_call.1} parent=31 // pred_region
          %v501 = vld [vmem:[#allocation2] sm:$0xff]
          %v502 = vmul.f32 %v501, 0.125
          %503 = vst [vmem:[%s219] sm:$0xff] %v502
        $region48: #{tpu_custom_call.1} parent=31 // pred_fallthru
          _
        %s504 = sand.u32 %s117, 1
        %s505 = scalar_lea.sflag [#allocation5], %s504
        %s506 = sand.u32 %s117, 1
        %s507 = smul.addr %s506, 8
        %s508 = scalar_lea.vmem [#allocation8], %s507
        // Predicated region
        $region49: #{tpu_custom_call.1} parent=31 // pred_check
          %p509 = pneg %p127
        $region50: #{tpu_custom_call.1} parent=31 // pred_check_branch
          %511 = sbr.rel (%p509) target = $region52
        $region51: #{tpu_custom_call.1} parent=31 // pred_region
          %s513 = ssub.s32 128, 128
          %514 = vsyncadd %s505, %s513
          %s515 = smul.addr %s23, 128
          %s516 = scalar_lea.hbm %s3, %s515
          %s518 = sshll.u32 %s508, 4
          %s519 = int_to_ptr.vmem [resolvable:$true] %s518
          %521 = dma.vmem_to_hbm [thread:$0]  %s519, 128, %s516, %s505
        $region52: #{tpu_custom_call.1} parent=31 // pred_fallthru
          _
      $region32: #{tpu_custom_call.1} parent=5 // pred_fallthru
        _
      %p522 = scmp.le.s32.totalorder 2, %s14
      // Predicated region
      $region53: #{tpu_custom_call.1} parent=5 // pred_check
        %p523 = pneg %p522
      $region54: #{tpu_custom_call.1} parent=5 // pred_check_branch
        %525 = sbr.rel (%p523) target = $region56
      $region55: #{tpu_custom_call.1} parent=5 // pred_region
        %s526 = ssub.s32 %s14, 2
        // Predicated region
        $region57: #{tpu_custom_call.1} parent=55 // pred_check
          %p527 = pneg %p133
        $region58: #{tpu_custom_call.1} parent=55 // pred_check_branch
          %529 = sbr.rel (%p527) target = $region60
        $region59: #{tpu_custom_call.1} parent=55 // pred_region
          %s530 = sand.u32 %s118, 1
          %s531 = scalar_lea.sflag [#allocation5], %s530
          %s532 = sand.u32 %s118, 1
          %s533 = smul.addr %s532, 8
          %s534 = scalar_lea.vmem [#allocation8], %s533
          %535 = dma.done %s531, 128
        $region60: #{tpu_custom_call.1} parent=55 // pred_fallthru
          _
      $region56: #{tpu_custom_call.1} parent=5 // pred_fallthru
        _
    $region6: #{tpu_custom_call.1} parent=1 // loop_footer
      %s18 = sadd.s32 1, %s14
    $region7: #{tpu_custom_call.1} parent=1 // loop_footer_branch
      %13 = sbr.rel target = $region3
    $region8: #{tpu_custom_call.1} parent=1 // loop_exit
      _
    %536 = vsyncpa [#allocation4], 1
    %s537 = scalar_lea.sflag [#allocation4], 1
    %538 = vsyncpa %s537, 1
    %539 = vsyncpa [#allocation7], 1
    %540 = vsyncpa [#allocation5], 1
    %s541 = scalar_lea.sflag [#allocation5], 1
    %542 = vsyncpa %s541, 1

</llo_original>
